<compile_context>
chip_gen: v6e
topology: v6e:2x2x1
jax: 0.10.0
libtpu: 0.0.40
codegen_flags: <defaults>
</compile_context>

<pallas_src>
import jax
import jax.numpy as jnp
from jax import lax
from jax.experimental import pallas as pl
from jax.experimental.pallas import tpu as pltpu


def _cdiv(a, b):
    return -(-a // b)


def _round_down(x, m):
    return (x // m) * m


def _round_up(x, m):
    return ((x + m - 1) // m) * m


def _vmem_capacity_bytes():
    try:
        return int(pltpu.get_tpu_info().vmem_capacity_bytes)
    except Exception:
        return 64 * 1024 * 1024  # conservative default (v7x per-TensorCore VMEM)


def _choose_tiles(B, N, D, rel_bytes, w_bytes, e_bytes, out_bytes, vmem_limit,
                  *, max_tb=256, max_tn=4096, step_target_bytes=2 << 20):
    """Pick (tb, tn): batch tile and object (reduction) tile."""
    # ---- batch tile ------------------------------------------------------
    if B <= 8:
        tb = B                                   # full-extent tile (allowed)
    elif B <= 2 * max_tb:
        # Split into >= 2 batch tiles so both v7x TensorCores get work.
        tb = _round_up(_cdiv(B, 2), 8)
    else:
        tb = max_tb
    # Shrink tb if rel/out/acc residency alone would crowd VMEM (huge D only).
    while tb > 8 and (2 * tb * D * (rel_bytes + out_bytes) + tb * D * 4
                      > vmem_limit // 3):
        tb = max(8, _round_down(tb // 2, 8))

    # ---- object (reduction) tile ----------------------------------------
    stream_bytes = D * (w_bytes + e_bytes)       # W+E bytes per object row
    tn_stream = max(128, step_target_bytes // max(1, stream_bytes))

    budget = int(vmem_limit * 0.6)               # headroom for temporaries
    fixed = 2 * tb * D * (rel_bytes + out_bytes)         # rel + out (2-buffered)
    fixed += tb * D * 4 + 2 * tb * 128 * 4               # acc + padded m/l scratch
    fixed += 2 * _round_up(N, 128) * 4                   # resident bias (generous)
    per_tn = 2 * stream_bytes                            # W + E double-buffered
    per_tn += 4 * tb * 4                                 # logits/p/mask f32 temps
    tn_vmem = max(8, (budget - fixed) // per_tn)

    tn = min(tn_stream, tn_vmem, max_tn)
    if tn >= N:
        return tb, N                             # single resident object tile
    tn = max(128, _round_down(tn, 128))
    if tn >= N:
        tn = N
    return tb, tn


def _make_kernel(B, N, TB, TN, b_ragged, n_ragged):
    def kernel(rel_ref, w_ref, b_ref, e_ref, out_ref, m_scr, l_scr, acc_scr):
        bi = pl.program_id(0)
        ni = pl.program_id(1)

        @pl.when(ni == 0)
        def _init():
            m_scr[...] = jnp.full_like(m_scr, -jnp.inf)
            l_scr[...] = jnp.zeros_like(l_scr)
            acc_scr[...] = jnp.zeros_like(acc_scr)

        rel = rel_ref[...]                                   # (TB, D)
        w = w_ref[...]                                       # (TN, D)
        e = e_ref[...]                                       # (TN, D)
        bias = b_ref[pl.ds(ni, 1), :].astype(jnp.float32)    # (1, TN) resident

        # logits = rel @ W.T + b  -- contract on D directly (no transpose).
        # Feed the MXU in the (possibly narrower) weight dtype; accumulate f32.
        rel_mm = rel if rel.dtype == w.dtype else rel.astype(w.dtype)
        logits = lax.dot_general(
            rel_mm, w,
            dimension_numbers=(((1,), (1,)), ((), ())),
            preferred_element_type=jnp.float32) + bias       # (TB, TN) f32

        if n_ragged:
            # Ragged object tail: OOB logits -> -inf; OOB E rows -> 0 so the
            # unspecified boundary-block padding can never pollute the acc.
            col = ni * TN + lax.broadcasted_iota(jnp.int32, (TB, TN), 1)
            logits = jnp.where(col < N, logits, -jnp.inf)
            erow = ni * TN + lax.broadcasted_iota(jnp.int32, (TN, 1), 0)
            e = jnp.where(erow < N, e, jnp.zeros_like(e))
        if b_ragged:
            # Dead batch rows: keep them finite (their output writes are dropped).
            row = bi * TB + lax.broadcasted_iota(jnp.int32, (TB, TN), 0)
            logits = jnp.where(row < B, logits, 0.0)

        # Online (streaming) softmax update.
        m_prev = m_scr[...]                                  # (TB, 1)
        m_new = jnp.maximum(m_prev, jnp.max(logits, axis=-1, keepdims=True))
        alpha = jnp.exp(m_prev - m_new)
        p = jnp.exp(logits - m_new)                          # (TB, TN) f32

        l_scr[...] = alpha * l_scr[...] + jnp.sum(p, axis=-1, keepdims=True)
        acc_scr[...] = alpha * acc_scr[...] + jnp.dot(
            p.astype(e.dtype), e, preferred_element_type=jnp.float32)
        m_scr[...] = m_new

        @pl.when(ni == pl.num_programs(1) - 1)
        def _finalize():
            out_ref[...] = (acc_scr[...] / l_scr[...]).astype(out_ref.dtype)

    return kernel


def attentive_linear(rel, proj_w, proj_b, emb_w, *, tb=None, tn=None):
    """rel: (B, D), proj_w: (N, D), proj_b: (N,), emb_w: (N, D) -> (B, D)."""
    B, D = rel.shape
    N, De = emb_w.shape
    assert De == D and proj_w.shape == (N, D) and proj_b.shape == (N,)

    vmem_cap = _vmem_capacity_bytes()                        # 64 MiB v7x, 128 MiB v5e/v6e
    vmem_limit = min(vmem_cap * 3 // 4, 96 * 1024 * 1024)    # raise v5e's 16 MiB default

    auto_tb, auto_tn = _choose_tiles(
        B, N, D,
        rel.dtype.itemsize, proj_w.dtype.itemsize, emb_w.dtype.itemsize,
        rel.dtype.itemsize, vmem_limit)
    tb = auto_tb if tb is None else tb
    tn = auto_tn if tn is None else tn

    num_b = _cdiv(B, tb)
    num_n = _cdiv(N, tn)
    n_pad = num_n * tn

    # Bias: pad to a whole number of object tiles, keep resident as (num_n, tn).
    bias = proj_b.astype(jnp.float32)
    if n_pad != N:
        bias = jnp.pad(bias, (0, n_pad - N))
    bias = bias.reshape(num_n, tn)

    kernel = _make_kernel(B=B, N=N, TB=tb, TN=tn,
                          b_ragged=(B % tb) != 0, n_ragged=(N % tn) != 0)

    cost = pl.CostEstimate(
        flops=4 * B * N * D,
        transcendentals=B * N,
        bytes_accessed=int(N * D * (proj_w.dtype.itemsize + emb_w.dtype.itemsize)
                           + 2 * B * D * rel.dtype.itemsize + n_pad * 4))

    # Per-step tiles are sized to ~2 MB of W+E, so default 2-deep buffering
    # already hides the DMA latency (no need for pl.Buffered(3)).
    # TODO(synk): int8 (v5e/v6e) / fp8 (v7x) weight storage with per-tile
    # scales would halve streamed bytes again; not implemented here.
    # TODO(synk): when B fits in a single batch tile, the N reduction could be
    # split across the two v7x TensorCores with a small (m, l, acc) combine.
    return pl.pallas_call(
        kernel,
        out_shape=jax.ShapeDtypeStruct((B, D), rel.dtype),
        grid_spec=pltpu.PrefetchScalarGridSpec(
            num_scalar_prefetch=0,
            grid=(num_b, num_n),                    # object reduction axis last
            in_specs=[
                pl.BlockSpec((tb, D), lambda bi, ni: (bi, 0)),      # rel
                pl.BlockSpec((tn, D), lambda bi, ni: (ni, 0)),      # W (streamed)
                pl.BlockSpec((num_n, tn), lambda bi, ni: (0, 0)),   # bias (resident)
                pl.BlockSpec((tn, D), lambda bi, ni: (ni, 0)),      # E (streamed)
            ],
            out_specs=pl.BlockSpec((tb, D), lambda bi, ni: (bi, 0)),
            scratch_shapes=[
                pltpu.VMEM((tb, 1), jnp.float32),   # running max  m
                pltpu.VMEM((tb, 1), jnp.float32),   # running sum  l
                pltpu.VMEM((tb, D), jnp.float32),   # unnormalized acc
            ],
        ),
        compiler_params=pltpu.CompilerParams(
            dimension_semantics=("parallel", "arbitrary"),
            vmem_limit_bytes=int(vmem_limit)),
        cost_estimate=cost,
    )(rel, proj_w, bias, emb_w)


def reference(rel, proj_w, proj_b, emb_w):
    logits = (rel.astype(jnp.float32) @ proj_w.astype(jnp.float32).T
              + proj_b.astype(jnp.float32)[None, :])
    attn = jax.nn.softmax(logits, axis=1)
    return attn @ emb_w.astype(jnp.float32)


if __name__ == "__main__":
    key = jax.random.PRNGKey(0)
    ks = jax.random.split(key, 8)

    # --- Case 1: small divisible shapes, f32 weights (PyTorch default) ----
    B, N, D = 8, 256, 128
    rel = jax.random.normal(ks[0], (B, D), dtype=jnp.float32)
    emb_w = jax.random.normal(ks[1], (N, D), dtype=jnp.float32)
    proj_w = jax.random.normal(ks[2], (N, D), dtype=jnp.float32) * 0.05
    proj_b = jax.random.normal(ks[3], (N,), dtype=jnp.float32) * 0.05

    out = jax.block_until_ready(attentive_linear(rel, proj_w, proj_b, emb_w))
    ref = reference(rel, proj_w, proj_b, emb_w)
    assert out.shape == (B, D)
    assert jnp.allclose(out, ref, atol=5e-3, rtol=5e-3), "f32 mismatch vs reference"

    # --- Case 2: bf16 weight storage (recommended: halves streamed HBM bytes)
    out_bf16 = jax.block_until_ready(attentive_linear(
        rel, proj_w.astype(jnp.bfloat16), proj_b, emb_w.astype(jnp.bfloat16)))
    ref_bf16 = reference(rel, proj_w.astype(jnp.bfloat16), proj_b,
                         emb_w.astype(jnp.bfloat16))
    assert jnp.allclose(out_bf16, ref_bf16, atol=3e-2, rtol=3e-2), \
        "bf16 mismatch vs reference"

    # --- Case 3: ragged batch & object tails, multi-tile streaming path ---
    B2, N2 = 20, 300
    rel2 = jax.random.normal(ks[4], (B2, D), dtype=jnp.float32)
    emb_w2 = jax.random.normal(ks[5], (N2, D), dtype=jnp.float32)
    proj_w2 = jax.random.normal(ks[6], (N2, D), dtype=jnp.float32) * 0.05
    proj_b2 = jax.random.normal(ks[7], (N2,), dtype=jnp.float32) * 0.05

    out2 = jax.block_until_ready(
        attentive_linear(rel2, proj_w2, proj_b2, emb_w2, tn=128))
    ref2 = reference(rel2, proj_w2, proj_b2, emb_w2)
    assert out2.shape == (B2, D)
    assert jnp.allclose(out2, ref2, atol=5e-3, rtol=5e-3), \
        "ragged-tail mismatch vs reference"

    print("KERNEL_OK")
</pallas_src>

<mosaic_0001>
module attributes {stable_mosaic.version = 11 : i64} {
  func.func @kernel(%arg0: i32, %arg1: i32, %arg2: memref<8x128xf32, #tpu.memory_space<vmem>>, %arg3: memref<256x128xf32, #tpu.memory_space<vmem>>, %arg4: memref<1x256xf32, #tpu.memory_space<vmem>>, %arg5: memref<256x128xf32, #tpu.memory_space<vmem>>, %arg6: memref<8x128xf32, #tpu.memory_space<vmem>>, %arg7: memref<8x1xf32, #tpu.memory_space<vmem>>, %arg8: memref<8x1xf32, #tpu.memory_space<vmem>>, %arg9: memref<8x128xf32, #tpu.memory_space<vmem>>) attributes {dimension_semantics = [#tpu.dimension_semantics<parallel>, #tpu.dimension_semantics<arbitrary>], iteration_bounds = array<i64: 1, 1>, scalar_prefetch = 0 : i64, scratch_operands = 3 : i64, tpu.core_type = #tpu.core_type<tc>, window_params = [{transform_indices = @transform_0, window_bounds = array<i64: 8, 128>}, {transform_indices = @transform_1, window_bounds = array<i64: 256, 128>}, {pipeline_mode = #tpu.pipeline_mode<synchronous>, transform_indices = @transform_2, window_bounds = array<i64: 1, 256>}, {transform_indices = @transform_3, window_bounds = array<i64: 256, 128>}, {transform_indices = @transform_4, window_bounds = array<i64: 8, 128>}]} {
    %c0_i32 = arith.constant 0 : i32
    %0 = arith.cmpi eq, %arg1, %c0_i32 : i32
    %1 = arith.extui %0 : i1 to i32
    %c0_i32_0 = arith.constant 0 : i32
    %2 = arith.cmpi ne, %1, %c0_i32_0 : i32
    scf.if %2 {
      %cst_24 = arith.constant 0xFF800000 : f32
      %36 = vector.broadcast %cst_24 : f32 to vector<8x1xf32>
      %c0_25 = arith.constant 0 : index
      %c0_26 = arith.constant 0 : index
      %37 = vector.load %arg7[%c0_25, %c0_26] : memref<8x1xf32, #tpu.memory_space<vmem>>, vector<8x1xf32>
      tpu.vector_store %arg7[%c0_25, %c0_26], %36 {strides = array<i32>} : memref<8x1xf32, #tpu.memory_space<vmem>>, vector<8x1xf32>,
      %cst_27 = arith.constant 0.000000e+00 : f32
      %38 = vector.broadcast %cst_27 : f32 to vector<8x1xf32>
      %c0_28 = arith.constant 0 : index
      %c0_29 = arith.constant 0 : index
      %39 = vector.load %arg8[%c0_28, %c0_29] : memref<8x1xf32, #tpu.memory_space<vmem>>, vector<8x1xf32>
      tpu.vector_store %arg8[%c0_28, %c0_29], %38 {strides = array<i32>} : memref<8x1xf32, #tpu.memory_space<vmem>>, vector<8x1xf32>,
      %cst_30 = arith.constant 0.000000e+00 : f32
      %40 = vector.broadcast %cst_30 : f32 to vector<8x128xf32>
      %c0_31 = arith.constant 0 : index
      %c0_32 = arith.constant 0 : index
      %41 = vector.load %arg9[%c0_31, %c0_32] : memref<8x128xf32, #tpu.memory_space<vmem>>, vector<8x128xf32>
      tpu.vector_store %arg9[%c0_31, %c0_32], %40 {strides = array<i32>} : memref<8x128xf32, #tpu.memory_space<vmem>>, vector<8x128xf32>,
    } else {
    }
    %c0 = arith.constant 0 : index
    %c0_1 = arith.constant 0 : index
    %3 = vector.load %arg2[%c0, %c0_1] : memref<8x128xf32, #tpu.memory_space<vmem>>, vector<8x128xf32>
    %c0_2 = arith.constant 0 : index
    %c0_3 = arith.constant 0 : index
    %4 = vector.load %arg3[%c0_2, %c0_3] : memref<256x128xf32, #tpu.memory_space<vmem>>, vector<256x128xf32>
    %c0_4 = arith.constant 0 : index
    %c0_5 = arith.constant 0 : index
    %5 = vector.load %arg5[%c0_4, %c0_5] : memref<256x128xf32, #tpu.memory_space<vmem>>, vector<256x128xf32>
    %6 = arith.index_cast %arg1 : i32 to index
    %c0_6 = arith.constant 0 : index
    %7 = vector.load %arg4[%6, %c0_6] : memref<1x256xf32, #tpu.memory_space<vmem>>, vector<1x256xf32>
    %cst = arith.constant dense<0.000000e+00> : vector<8x256xf32>
    %8 = tpu.matmul %3, %4, %cst {dimension_numbers = #tpu.dot_dimension_numbers<[1], [1], [0], [0], [0, 0, 1, 0], [], []>} : vector<8x128xf32>, vector<256x128xf32>, vector<8x256xf32> -> vector<8x256xf32>
    %9 = vector.broadcast %7 : vector<1x256xf32> to vector<8x256xf32>
    %10 = arith.addf %8, %9 : vector<8x256xf32>
    %c0_7 = arith.constant 0 : index
    %c0_8 = arith.constant 0 : index
    %11 = vector.load %arg7[%c0_7, %c0_8] : memref<8x1xf32, #tpu.memory_space<vmem>>, vector<8x1xf32>
    %cst_9 = arith.constant dense<0xFF800000> : vector<8xf32>
    %12 = vector.multi_reduction <maximumf>, %10, %cst_9 [1] : vector<8x256xf32> to vector<8xf32>
    %13 = vector.shape_cast %12 : vector<8xf32> to vector<8x1xf32>
    %14 = arith.maximumf %11, %13 : vector<8x1xf32>
    %15 = arith.subf %11, %14 : vector<8x1xf32>
    %16 = math.exp %15 : vector<8x1xf32>
    %17 = vector.broadcast %14 : vector<8x1xf32> to vector<8x256xf32>
    %18 = arith.subf %10, %17 : vector<8x256xf32>
    %19 = math.exp %18 : vector<8x256xf32>
    %c0_10 = arith.constant 0 : index
    %c0_11 = arith.constant 0 : index
    %20 = vector.load %arg8[%c0_10, %c0_11] : memref<8x1xf32, #tpu.memory_space<vmem>>, vector<8x1xf32>
    %21 = arith.mulf %16, %20 : vector<8x1xf32>
    %cst_12 = arith.constant dense<0.000000e+00> : vector<8xf32>
    %22 = vector.multi_reduction <add>, %19, %cst_12 [1] : vector<8x256xf32> to vector<8xf32>
    %23 = vector.shape_cast %22 : vector<8xf32> to vector<8x1xf32>
    %24 = arith.addf %21, %23 : vector<8x1xf32>
    %c0_13 = arith.constant 0 : index
    %c0_14 = arith.constant 0 : index
    %25 = vector.load %arg8[%c0_13, %c0_14] : memref<8x1xf32, #tpu.memory_space<vmem>>, vector<8x1xf32>
    tpu.vector_store %arg8[%c0_13, %c0_14], %24 {strides = array<i32>} : memref<8x1xf32, #tpu.memory_space<vmem>>, vector<8x1xf32>,
    %c0_15 = arith.constant 0 : index
    %c0_16 = arith.constant 0 : index
    %26 = vector.load %arg9[%c0_15, %c0_16] : memref<8x128xf32, #tpu.memory_space<vmem>>, vector<8x128xf32>
    %27 = vector.broadcast %16 : vector<8x1xf32> to vector<8x128xf32>
    %28 = arith.mulf %27, %26 : vector<8x128xf32>
    %cst_17 = arith.constant dense<0.000000e+00> : vector<8x128xf32>
    %29 = tpu.matmul %19, %5, %cst_17 {dimension_numbers = #tpu.dot_dimension_numbers<[1], [0], [0], [1], [0, 0, 1, 1], [], []>} : vector<8x256xf32>, vector<256x128xf32>, vector<8x128xf32> -> vector<8x128xf32>
    %30 = arith.addf %28, %29 : vector<8x128xf32>
    %c0_18 = arith.constant 0 : index
    %c0_19 = arith.constant 0 : index
    %31 = vector.load %arg9[%c0_18, %c0_19] : memref<8x128xf32, #tpu.memory_space<vmem>>, vector<8x128xf32>
    tpu.vector_store %arg9[%c0_18, %c0_19], %30 {strides = array<i32>} : memref<8x128xf32, #tpu.memory_space<vmem>>, vector<8x128xf32>,
    %c0_20 = arith.constant 0 : index
    %c0_21 = arith.constant 0 : index
    %32 = vector.load %arg7[%c0_20, %c0_21] : memref<8x1xf32, #tpu.memory_space<vmem>>, vector<8x1xf32>
    tpu.vector_store %arg7[%c0_20, %c0_21], %14 {strides = array<i32>} : memref<8x1xf32, #tpu.memory_space<vmem>>, vector<8x1xf32>,
    %c0_i32_22 = arith.constant 0 : i32
    %33 = arith.cmpi eq, %arg1, %c0_i32_22 : i32
    %34 = arith.extui %33 : i1 to i32
    %c0_i32_23 = arith.constant 0 : i32
    %35 = arith.cmpi ne, %34, %c0_i32_23 : i32
    scf.if %35 {
      %c0_24 = arith.constant 0 : index
      %c0_25 = arith.constant 0 : index
      %36 = vector.load %arg9[%c0_24, %c0_25] : memref<8x128xf32, #tpu.memory_space<vmem>>, vector<8x128xf32>
      %c0_26 = arith.constant 0 : index
      %c0_27 = arith.constant 0 : index
      %37 = vector.load %arg8[%c0_26, %c0_27] : memref<8x1xf32, #tpu.memory_space<vmem>>, vector<8x1xf32>
      %38 = vector.broadcast %37 : vector<8x1xf32> to vector<8x128xf32>
      %39 = arith.divf %36, %38 : vector<8x128xf32>
      %c0_28 = arith.constant 0 : index
      %c0_29 = arith.constant 0 : index
      %40 = vector.load %arg6[%c0_28, %c0_29] : memref<8x128xf32, #tpu.memory_space<vmem>>, vector<8x128xf32>
      tpu.vector_store %arg6[%c0_28, %c0_29], %39 {strides = array<i32>} : memref<8x128xf32, #tpu.memory_space<vmem>>, vector<8x128xf32>,
    } else {
    }
    return
  }
  func.func @transform_0(%arg0: i32, %arg1: i32) -> (i32, i32) {
    %c0_i32 = arith.constant 0 : i32
    %c0_i32_0 = arith.constant 0 : i32
    return %arg0, %c0_i32 : i32, i32
  }
  func.func @transform_1(%arg0: i32, %arg1: i32) -> (i32, i32) {
    %c0_i32 = arith.constant 0 : i32
    %c0_i32_0 = arith.constant 0 : i32
    return %arg1, %c0_i32 : i32, i32
  }
  func.func @transform_2(%arg0: i32, %arg1: i32) -> (i32, i32) {
    %c0_i32 = arith.constant 0 : i32
    %c0_i32_0 = arith.constant 0 : i32
    %c0_i32_1 = arith.constant 0 : i32
    return %c0_i32, %c0_i32_0 : i32, i32
  }
  func.func @transform_3(%arg0: i32, %arg1: i32) -> (i32, i32) {
    %c0_i32 = arith.constant 0 : i32
    %c0_i32_0 = arith.constant 0 : i32
    return %arg1, %c0_i32 : i32, i32
  }
  func.func @transform_4(%arg0: i32, %arg1: i32) -> (i32, i32) {
    %c0_i32 = arith.constant 0 : i32
    %c0_i32_0 = arith.constant 0 : i32
    return %arg0, %c0_i32 : i32, i32
  }
}

</mosaic_0001>

<llo_original>
// kernel: tpu_custom_call.1
$region0: #{tpu_custom_call.1}
  #allocation0 [shape = 'u32[]', space=smem, size = 0x4, offset = 0x4, fixed_abs, tag = 'smem constant byte address 0x4 - core index']
  #allocation1 [shape = 'u32[144,128]{1,0:T(1,128)}', space=vmem, size = 0x12000, scoped, tag = 'internal scratch']
  #allocation2 [shape = 'f32[8,1]{1,0:T(8,128)}', space=vmem, size = 0x1000, scoped, tag = 'scratch operand']
  #allocation3 [shape = 'f32[8,1]{1,0:T(8,128)}', space=vmem, size = 0x1000, scoped, tag = 'scratch operand']
  #allocation4 [shape = 'f32[8,128]{1,0:T(8,128)}', space=vmem, size = 0x1000, scoped, tag = 'scratch operand']
  %s0 = inlined_call_operand.hbm [shape: f32[8,128], index: 0, kind: input, shape index: {}]
  %s1 = inlined_call_operand.hbm [shape: f32[256,128], index: 1, kind: input, shape index: {}]
  %s2 = inlined_call_operand.vmem [shape: f32[1,256], index: 2, kind: input, shape index: {}]
  %s3 = inlined_call_operand.hbm [shape: f32[256,128], index: 3, kind: input, shape index: {}]
  %s4 = inlined_call_operand.hbm [shape: f32[8,128], index: 4, kind: output, shape index: {}]
  %s5 = sld [smem:[#allocation0]]
  $region46: #{tpu_custom_call.1} parent=0
    _
  %s7 = ssub.s32 1, %s5
  %s8 = scalar_select 0, %s7, %s5
  $region1: #{tpu_custom_call.1} parent=0
    #allocation5 [shape = 'u8[4096]{0}', space=vmem, size = 0x1000, scoped, tag = 'input window, operand 0, single buffered']
    #allocation6 [shape = 's32[1]{0}', space=sflag, size = 0x4, scoped, tag = 'scoped memory for tpu_custom_call.1']
    #allocation7 [shape = 's32[1]{0}', space=sflag, size = 0x4, scoped, tag = 'scoped memory for tpu_custom_call.1']
    #allocation8 [shape = 'u8[131072]{0}', space=vmem, size = 0x20000, scoped, tag = 'input window, operand 1, single buffered']
    #allocation9 [shape = 's32[1]{0}', space=sflag, size = 0x4, scoped, tag = 'scoped memory for tpu_custom_call.1']
    #allocation10 [shape = 'u8[131072]{0}', space=vmem, size = 0x20000, scoped, tag = 'input window, operand 3, single buffered']
    #allocation11 [shape = 'u8[4096]{0}', space=vmem, size = 0x1000, scoped, tag = 'output window, operand 0, single buffered']
    %9 = vsyncpa [#allocation6], 0
    %10 = vsyncpa [#allocation9], 0
    %11 = vsyncpa [#allocation7], 0
    // Predicated region
    $region2: #{tpu_custom_call.1} parent=1 // pred_check
      _
    $region3: #{tpu_custom_call.1} parent=1 // pred_check_branch
      %13 = sbr.rel (0) target = $region5
    $region4: #{tpu_custom_call.1} parent=1 // pred_region
      %s15 = ssub.s32 128, 128
      %16 = vsyncadd [#allocation6], %s15
      %s18 = sshll.u32 [#allocation5], 4
      %s19 = int_to_ptr.vmem [resolvable:$true] %s18
      %21 = dma.hbm_to_vmem [thread:$0]  %s0, 128, %s19, [#allocation6]
    $region5: #{tpu_custom_call.1} parent=1 // pred_fallthru
      _
    // Predicated region
    $region6: #{tpu_custom_call.1} parent=1 // pred_check
      _
    $region7: #{tpu_custom_call.1} parent=1 // pred_check_branch
      %23 = sbr.rel (0) target = $region9
    $region8: #{tpu_custom_call.1} parent=1 // pred_region
      %s25 = ssub.s32 4096, 4096
      %26 = vsyncadd [#allocation9], %s25
      %s27 = sshll.u32 [#allocation8], 4
      %s28 = int_to_ptr.vmem [resolvable:$true] %s27
      %33 = dma.hbm_to_vmem [thread:$0]  %s1, 4096, %s28, [#allocation9], 128, 128, 8
    $region9: #{tpu_custom_call.1} parent=1 // pred_fallthru
      _
    // Predicated region
    $region10: #{tpu_custom_call.1} parent=1 // pred_check
      _
    $region11: #{tpu_custom_call.1} parent=1 // pred_check_branch
      %35 = sbr.rel (0) target = $region13
    $region12: #{tpu_custom_call.1} parent=1 // pred_region
      _
    $region13: #{tpu_custom_call.1} parent=1 // pred_fallthru
      _
    // Predicated region
    $region14: #{tpu_custom_call.1} parent=1 // pred_check
      _
    $region15: #{tpu_custom_call.1} parent=1 // pred_check_branch
      %37 = sbr.rel (0) target = $region17
    $region16: #{tpu_custom_call.1} parent=1 // pred_region
      %s39 = ssub.s32 4096, 4096
      %40 = vsyncadd [#allocation9], %s39
      %s41 = sshll.u32 [#allocation10], 4
      %s42 = int_to_ptr.vmem [resolvable:$true] %s41
      %47 = dma.hbm_to_vmem [thread:$0]  %s3, 4096, %s42, [#allocation9], 128, 128, 8
    $region17: #{tpu_custom_call.1} parent=1 // pred_fallthru
      _
    // Predicated region
    $region18: #{tpu_custom_call.1} parent=1 // pred_check
      _
    $region19: #{tpu_custom_call.1} parent=1 // pred_check_branch
      %49 = sbr.rel (0) target = $region21
    $region20: #{tpu_custom_call.1} parent=1 // pred_region
      %50 = dma.done [#allocation6], 128
    $region21: #{tpu_custom_call.1} parent=1 // pred_fallthru
      _
    // Predicated region
    $region22: #{tpu_custom_call.1} parent=1 // pred_check
      _
    $region23: #{tpu_custom_call.1} parent=1 // pred_check_branch
      %52 = sbr.rel (0) target = $region25
    $region24: #{tpu_custom_call.1} parent=1 // pred_region
      %53 = dma.done [#allocation9], 4096
    $region25: #{tpu_custom_call.1} parent=1 // pred_fallthru
      _
    // Predicated region
    $region26: #{tpu_custom_call.1} parent=1 // pred_check
      _
    $region27: #{tpu_custom_call.1} parent=1 // pred_check_branch
      %55 = sbr.rel (0) target = $region29
    $region28: #{tpu_custom_call.1} parent=1 // pred_region
      %56 = dma.done [#allocation9], 4096
    $region29: #{tpu_custom_call.1} parent=1 // pred_fallthru
      _
    %p57 = scmp.eq.s32.totalorder 0, 0
    // Predicated region
    $region30: #{tpu_custom_call.1} parent=1 // pred_check
      %p58 = pneg %p57
    $region31: #{tpu_custom_call.1} parent=1 // pred_check_branch
      %60 = sbr.rel (%p58) target = $region33
    $region32: #{tpu_custom_call.1} parent=1 // pred_region
      %vm61 = vcmask 7168
      %62 = vst.msk [vmem:[#allocation2] sm:$0xff] %vm61, -inf
      %63 = vst.msk [vmem:[#allocation3] sm:$0xff] %vm61, 0.0
      %64 = vst [vmem:[#allocation4] sm:$0xff] 0.0
    $region33: #{tpu_custom_call.1} parent=1 // pred_fallthru
      _
    %v65 = vld [vmem:[#allocation5] sm:$0xff]
    %v66 = vld [vmem:[#allocation8] sm:$0xff]
    %v67 = vld [vmem:[#allocation8 + $0x8] sm:$0xff]
    %v68 = vld [vmem:[#allocation8 + $0x10] sm:$0xff]
    %v69 = vld [vmem:[#allocation8 + $0x18] sm:$0xff]
    %v70 = vld [vmem:[#allocation8 + $0x20] sm:$0xff]
    %v71 = vld [vmem:[#allocation8 + $0x28] sm:$0xff]
    %v72 = vld [vmem:[#allocation8 + $0x30] sm:$0xff]
    %v73 = vld [vmem:[#allocation8 + $0x38] sm:$0xff]
    %v74 = vld [vmem:[#allocation8 + $0x40] sm:$0xff]
    %v75 = vld [vmem:[#allocation8 + $0x48] sm:$0xff]
    %v76 = vld [vmem:[#allocation8 + $0x50] sm:$0xff]
    %v77 = vld [vmem:[#allocation8 + $0x58] sm:$0xff]
    %v78 = vld [vmem:[#allocation8 + $0x60] sm:$0xff]
    %v79 = vld [vmem:[#allocation8 + $0x68] sm:$0xff]
    %v80 = vld [vmem:[#allocation8 + $0x70] sm:$0xff]
    %v81 = vld [vmem:[#allocation8 + $0x78] sm:$0xff]
    %v82 = vld [vmem:[#allocation8 + $0x80] sm:$0xff]
    %v83 = vld [vmem:[#allocation8 + $0x88] sm:$0xff]
    %v84 = vld [vmem:[#allocation8 + $0x90] sm:$0xff]
    %v85 = vld [vmem:[#allocation8 + $0x98] sm:$0xff]
    %v86 = vld [vmem:[#allocation8 + $0xa0] sm:$0xff]
    %v87 = vld [vmem:[#allocation8 + $0xa8] sm:$0xff]
    %v88 = vld [vmem:[#allocation8 + $0xb0] sm:$0xff]
    %v89 = vld [vmem:[#allocation8 + $0xb8] sm:$0xff]
    %v90 = vld [vmem:[#allocation8 + $0xc0] sm:$0xff]
    %v91 = vld [vmem:[#allocation8 + $0xc8] sm:$0xff]
    %v92 = vld [vmem:[#allocation8 + $0xd0] sm:$0xff]
    %v93 = vld [vmem:[#allocation8 + $0xd8] sm:$0xff]
    %v94 = vld [vmem:[#allocation8 + $0xe0] sm:$0xff]
    %v95 = vld [vmem:[#allocation8 + $0xe8] sm:$0xff]
    %v96 = vld [vmem:[#allocation8 + $0xf0] sm:$0xff]
    %v97 = vld [vmem:[#allocation8 + $0xf8] sm:$0xff]
    %v98 = vld [vmem:[#allocation10] sm:$0xff]
    %v99 = vld [vmem:[#allocation10 + $0x8] sm:$0xff]
    %v100 = vld [vmem:[#allocation10 + $0x10] sm:$0xff]
    %v101 = vld [vmem:[#allocation10 + $0x18] sm:$0xff]
    %v102 = vld [vmem:[#allocation10 + $0x20] sm:$0xff]
    %v103 = vld [vmem:[#allocation10 + $0x28] sm:$0xff]
    %v104 = vld [vmem:[#allocation10 + $0x30] sm:$0xff]
    %v105 = vld [vmem:[#allocation10 + $0x38] sm:$0xff]
    %v106 = vld [vmem:[#allocation10 + $0x40] sm:$0xff]
    %v107 = vld [vmem:[#allocation10 + $0x48] sm:$0xff]
    %v108 = vld [vmem:[#allocation10 + $0x50] sm:$0xff]
    %v109 = vld [vmem:[#allocation10 + $0x58] sm:$0xff]
    %v110 = vld [vmem:[#allocation10 + $0x60] sm:$0xff]
    %v111 = vld [vmem:[#allocation10 + $0x68] sm:$0xff]
    %v112 = vld [vmem:[#allocation10 + $0x70] sm:$0xff]
    %v113 = vld [vmem:[#allocation10 + $0x78] sm:$0xff]
    %v114 = vld [vmem:[#allocation10 + $0x80] sm:$0xff]
    %v115 = vld [vmem:[#allocation10 + $0x88] sm:$0xff]
    %v116 = vld [vmem:[#allocation10 + $0x90] sm:$0xff]
    %v117 = vld [vmem:[#allocation10 + $0x98] sm:$0xff]
    %v118 = vld [vmem:[#allocation10 + $0xa0] sm:$0xff]
    %v119 = vld [vmem:[#allocation10 + $0xa8] sm:$0xff]
    %v120 = vld [vmem:[#allocation10 + $0xb0] sm:$0xff]
    %v121 = vld [vmem:[#allocation10 + $0xb8] sm:$0xff]
    %v122 = vld [vmem:[#allocation10 + $0xc0] sm:$0xff]
    %v123 = vld [vmem:[#allocation10 + $0xc8] sm:$0xff]
    %v124 = vld [vmem:[#allocation10 + $0xd0] sm:$0xff]
    %v125 = vld [vmem:[#allocation10 + $0xd8] sm:$0xff]
    %v126 = vld [vmem:[#allocation10 + $0xe0] sm:$0xff]
    %v127 = vld [vmem:[#allocation10 + $0xe8] sm:$0xff]
    %v128 = vld [vmem:[#allocation10 + $0xf0] sm:$0xff]
    %v129 = vld [vmem:[#allocation10 + $0xf8] sm:$0xff]
    %s130 = smul.u32 0, 2
    %s131 = scalar_lea.vmem %s2, %s130
    %v132 = vld [vmem:[%s131] sm:$0x3]
    %v134 = vlaneseq
    %v135 = vshrl.u32 %v134, 7
    %v136 = vsub.s32 0, %v135
    %v137 = vrot.slane %v132, %v136
    %v138 = vlaneseq
    %v139 = vshrl.u32 %v138, 7
    %v140 = vsub.s32 1, %v139
    %v141 = vrot.slane %v132, %v140
    %144 = vmatprep.subr.mxu0 0.0
    %145 = vmatpush1.xpose.msra.mxu0 %v81
    %146 = vmatprep.subr.mxu0 0.0
    %147 = vmatpush1.xpose.msra.mxu0 %v80
    %148 = vmatprep.subr.mxu0 0.0
    %149 = vmatpush1.xpose.msra.mxu0 %v79
    %150 = vmatprep.subr.mxu0 0.0
    %151 = vmatpush1.xpose.msra.mxu0 %v78
    %152 = vmatprep.subr.mxu0 0.0
    %153 = vmatpush1.xpose.msra.mxu0 %v77
    %154 = vmatprep.subr.mxu0 0.0
    %155 = vmatpush1.xpose.msra.mxu0 %v76
    %156 = vmatprep.subr.mxu0 0.0
    %157 = vmatpush1.xpose.msra.mxu0 %v75
    %158 = vmatprep.subr.mxu0 0.0
    %159 = vmatpush1.xpose.msra.mxu0 %v74
    %160 = vmatprep.subr.mxu0 0.0
    %161 = vmatpush1.xpose.msra.mxu0 %v73
    %162 = vmatprep.subr.mxu0 0.0
    %163 = vmatpush1.xpose.msra.mxu0 %v72
    %164 = vmatprep.subr.mxu0 0.0
    %165 = vmatpush1.xpose.msra.mxu0 %v71
    %166 = vmatprep.subr.mxu0 0.0
    %167 = vmatpush1.xpose.msra.mxu0 %v70
    %168 = vmatprep.subr.mxu0 0.0
    %169 = vmatpush1.xpose.msra.mxu0 %v69
    %170 = vmatprep.subr.mxu0 0.0
    %171 = vmatpush1.xpose.msra.mxu0 %v68
    %172 = vmatprep.subr.mxu0 0.0
    %173 = vmatpush1.xpose.msra.mxu0 %v67
    %174 = vmatprep.subr.mxu0 0.0
    %175 = vmatpush1.xpose.msra.mxu0 %v66
    %176 = vmatprep.subr.mxu0 0.0
    %177 = vmatpush2.xpose.msra.mxu0 %v97
    %178 = vmatprep.subr.mxu0 0.0
    %179 = vmatpush2.xpose.msra.mxu0 %v96
    %180 = vmatprep.subr.mxu0 0.0
    %181 = vmatpush2.xpose.msra.mxu0 %v95
    %182 = vmatprep.subr.mxu0 0.0
    %183 = vmatpush2.xpose.msra.mxu0 %v94
    %184 = vmatprep.subr.mxu0 0.0
    %185 = vmatpush2.xpose.msra.mxu0 %v93
    %186 = vmatprep.subr.mxu0 0.0
    %187 = vmatpush2.xpose.msra.mxu0 %v92
    %188 = vmatprep.subr.mxu0 0.0
    %189 = vmatpush2.xpose.msra.mxu0 %v91
    %190 = vmatprep.subr.mxu0 0.0
    %191 = vmatpush2.xpose.msra.mxu0 %v90
    %192 = vmatprep.subr.mxu0 0.0
    %193 = vmatpush2.xpose.msra.mxu0 %v89
    %194 = vmatprep.subr.mxu0 0.0
    %195 = vmatpush2.xpose.msra.mxu0 %v88
    %196 = vmatprep.subr.mxu0 0.0
    %197 = vmatpush2.xpose.msra.mxu0 %v87
    %198 = vmatprep.subr.mxu0 0.0
    %199 = vmatpush2.xpose.msra.mxu0 %v86
    %200 = vmatprep.subr.mxu0 0.0
    %201 = vmatpush2.xpose.msra.mxu0 %v85
    %202 = vmatprep.subr.mxu0 0.0
    %203 = vmatpush2.xpose.msra.mxu0 %v84
    %204 = vmatprep.subr.mxu0 0.0
    %205 = vmatpush2.xpose.msra.mxu0 %v83
    %206 = vmatprep.subr.mxu0 0.0
    %207 = vmatpush2.xpose.msra.mxu0 %v82
    %208 = vmatprep.mubr.f32.mxu0 0.0
    %209 = vmatmul.mubr.f32.gmra.mxu0 %v65
    %v210 = vpop.f32.mrf.mxu0
    %v211 = vadd.f32 %v137, %v210
    %v212 = vpop.f32.mrf.mxu0
    %v213 = vadd.f32 %v141, %v212
    %214 = vdwg.mxu0
    %v215 = vld [vmem:[#allocation2] sm:$0xff]
    %v216 = vmax.f32 %v211, %v213
    %217 = vmax.xlane.f32.xlu0 %v216
    %v218 = vpop.xlane.xlu0 %217
    %v219 = vmax.f32 %v215, %v218
    %v220 = vsub.f32 %v215, %v219
    %v221 = vmul.f32 %v220, 1.442695
    %v222 = vpow.pop %v221
    %224 = vset.pattern.permute.xlu0 0
    %225 = vperm.xlu0 %224, %v219
    %v226 = vpop.permute.xlu0 %225
    %v228 = vsub.f32 %v211, %v226
    %v229 = vsub.f32 %v213, %v226
    %v230 = vmul.f32 %v228, 1.442695
    %v231 = vpow.pop %v230
    %v232 = vmul.f32 %v229, 1.442695
    %v233 = vpow.pop %v232
    %v234 = vld [vmem:[#allocation3] sm:$0xff]
    %v235 = vmul.f32 %v222, %v234
    %v236 = vadd.f32 %v231, %v233
    %237 = vadd.xlane.f32.xlu0 %v236
    %v238 = vpop.xlane.xlu0 %237
    %v239 = vadd.f32 %v235, %v238
    %vm240 = vcmask 7168
    %241 = vst.msk [vmem:[#allocation3] sm:$0xff] %vm240, %v239
    %v242 = vld [vmem:[#allocation4] sm:$0xff]
    %244 = vset.pattern.permute.xlu0 0
    %245 = vperm.xlu0 %244, %v222
    %v246 = vpop.permute.xlu0 %245
    %v248 = vmul.f32 %v246, %v242
    %249 = vmatprep.subr.mxu0 0.0
    %250 = vmatpush1.msra.mxu0 %v113
    %251 = vmatprep.subr.mxu0 0.0
    %252 = vmatpush1.msra.mxu0 %v112
    %253 = vmatprep.subr.mxu0 0.0
    %254 = vmatpush1.msra.mxu0 %v111
    %255 = vmatprep.subr.mxu0 0.0
    %256 = vmatpush1.msra.mxu0 %v110
    %257 = vmatprep.subr.mxu0 0.0
    %258 = vmatpush1.msra.mxu0 %v109
    %259 = vmatprep.subr.mxu0 0.0
    %260 = vmatpush1.msra.mxu0 %v108
    %261 = vmatprep.subr.mxu0 0.0
    %262 = vmatpush1.msra.mxu0 %v107
    %263 = vmatprep.subr.mxu0 0.0
    %264 = vmatpush1.msra.mxu0 %v106
    %265 = vmatprep.subr.mxu0 0.0
    %266 = vmatpush1.msra.mxu0 %v105
    %267 = vmatprep.subr.mxu0 0.0
    %268 = vmatpush1.msra.mxu0 %v104
    %269 = vmatprep.subr.mxu0 0.0
    %270 = vmatpush1.msra.mxu0 %v103
    %271 = vmatprep.subr.mxu0 0.0
    %272 = vmatpush1.msra.mxu0 %v102
    %273 = vmatprep.subr.mxu0 0.0
    %274 = vmatpush1.msra.mxu0 %v101
    %275 = vmatprep.subr.mxu0 0.0
    %276 = vmatpush1.msra.mxu0 %v100
    %277 = vmatprep.subr.mxu0 0.0
    %278 = vmatpush1.msra.mxu0 %v99
    %279 = vmatprep.subr.mxu0 0.0
    %280 = vmatpush1.msra.mxu0 %v98
    %281 = vmatprep.subr.mxu0 0.0
    %282 = vmatpush2.msra.mxu0 %v129
    %283 = vmatprep.subr.mxu0 0.0
    %284 = vmatpush2.msra.mxu0 %v128
    %285 = vmatprep.subr.mxu0 0.0
    %286 = vmatpush2.msra.mxu0 %v127
    %287 = vmatprep.subr.mxu0 0.0
    %288 = vmatpush2.msra.mxu0 %v126
    %289 = vmatprep.subr.mxu0 0.0
    %290 = vmatpush2.msra.mxu0 %v125
    %291 = vmatprep.subr.mxu0 0.0
    %292 = vmatpush2.msra.mxu0 %v124
    %293 = vmatprep.subr.mxu0 0.0
    %294 = vmatpush2.msra.mxu0 %v123
    %295 = vmatprep.subr.mxu0 0.0
    %296 = vmatpush2.msra.mxu0 %v122
    %297 = vmatprep.subr.mxu0 0.0
    %298 = vmatpush2.msra.mxu0 %v121
    %299 = vmatprep.subr.mxu0 0.0
    %300 = vmatpush2.msra.mxu0 %v120
    %301 = vmatprep.subr.mxu0 0.0
    %302 = vmatpush2.msra.mxu0 %v119
    %303 = vmatprep.subr.mxu0 0.0
    %304 = vmatpush2.msra.mxu0 %v118
    %305 = vmatprep.subr.mxu0 0.0
    %306 = vmatpush2.msra.mxu0 %v117
    %307 = vmatprep.subr.mxu0 0.0
    %308 = vmatpush2.msra.mxu0 %v116
    %309 = vmatprep.subr.mxu0 0.0
    %310 = vmatpush2.msra.mxu0 %v115
    %311 = vmatprep.subr.mxu0 0.0
    %312 = vmatpush2.msra.mxu0 %v114
    %313 = vmatprep.mubr.f32.mxu0 %v233
    %314 = vmatmul.mubr.f32.gmra.mxu0 %v231
    %v315 = vpop.f32.mrf.mxu0
    %v316 = vadd.f32 0.0, %v315
    %v317 = vpop.f32.mrf.mxu0
    %318 = vdwg.mxu0
    %v319 = vadd.f32 %v248, %v316
    %320 = vst [vmem:[#allocation4] sm:$0xff] %v319
    %321 = vst.msk [vmem:[#allocation2] sm:$0xff] %vm240, %v219
    // Predicated region
    $region34: #{tpu_custom_call.1} parent=1 // pred_check
      %p322 = pneg %p57
    $region35: #{tpu_custom_call.1} parent=1 // pred_check_branch
      %324 = sbr.rel (%p322) target = $region37
    $region36: #{tpu_custom_call.1} parent=1 // pred_region
      %v325 = vld [vmem:[#allocation4] sm:$0xff]
      %v326 = vld [vmem:[#allocation3] sm:$0xff]
      %328 = vset.pattern.permute.xlu0 0
      %329 = vperm.xlu0 %328, %v326
      %v330 = vpop.permute.xlu0 %329
      %v332 = vrcp.pop %v330
      %v333 = vmul.f32 %v325, %v332
      %334 = vst [vmem:[#allocation11] sm:$0xff] %v333
    $region37: #{tpu_custom_call.1} parent=1 // pred_fallthru
      _
    // Predicated region
    $region38: #{tpu_custom_call.1} parent=1 // pred_check
      _
    $region39: #{tpu_custom_call.1} parent=1 // pred_check_branch
      %336 = sbr.rel (0) target = $region41
    $region40: #{tpu_custom_call.1} parent=1 // pred_region
      %s338 = ssub.s32 128, 128
      %339 = vsyncadd [#allocation7], %s338
      %s341 = sshll.u32 [#allocation11], 4
      %s342 = int_to_ptr.vmem [resolvable:$true] %s341
      %344 = dma.vmem_to_hbm [thread:$0]  %s342, 128, %s4, [#allocation7]
    $region41: #{tpu_custom_call.1} parent=1 // pred_fallthru
      _
    // Predicated region
    $region42: #{tpu_custom_call.1} parent=1 // pred_check
      _
    $region43: #{tpu_custom_call.1} parent=1 // pred_check_branch
      %346 = sbr.rel (0) target = $region45
    $region44: #{tpu_custom_call.1} parent=1 // pred_region
      %347 = dma.done [#allocation7], 128
    $region45: #{tpu_custom_call.1} parent=1 // pred_fallthru
      _
    %348 = vsyncpa [#allocation6], 1
    %349 = vsyncpa [#allocation9], 1
    %350 = vsyncpa [#allocation7], 1

</llo_original>
